<compile_context>
chip_gen: v6e
topology: v6e:2x2x1
jax: 0.10.0
libtpu: 0.0.40
codegen_flags: <defaults>
</compile_context>

<pallas_src>
import functools

import jax
import jax.numpy as jnp
from jax import lax
from jax.experimental import pallas as pl
from jax.experimental.pallas import tpu as pltpu


def _round_up(v, m):
    return -(-v // m) * m


def _round_down(v, m):
    return (v // m) * m


def _vmem_capacity_bytes():
    """Chip VMEM capacity; conservative 64 MiB fallback (safe for v7x)."""
    try:
        return int(pltpu.get_tpu_info().vmem_capacity_bytes)
    except Exception:  # not on TPU / older API
        return 64 * 1024 * 1024


def _flatten_width(total):
    """Largest lane width in {1024,512,256,128} dividing total, else None."""
    for w in (1024, 512, 256, 128):
        if total % w == 0:
            return w
    return None


def _choose_tiles(n, c, itemsize, target_block_bytes, block_rows=None, block_cols=None):
    """Pick (block_rows, block_cols) targeting ~target_block_bytes per input block."""
    elems_budget = max(target_block_bytes // itemsize, 8 * 128)
    sub = 8 if itemsize >= 4 else 16  # bf16 packs 16 sublanes per vreg

    user_rows = block_rows is not None

    # Columns: full-extent C unless very wide (then 128-multiple column tiles).
    if block_cols is None:
        if _round_up(c, 128) * sub <= elems_budget:
            block_cols = c
        else:
            block_cols = max(128, _round_down(elems_budget // sub, 128))
    block_cols = min(block_cols, c)
    if block_cols != c:
        block_cols = max(128, _round_down(block_cols, 128))
        block_cols = min(block_cols, c)

    col_lanes = _round_up(block_cols, 128)
    row_cap = max(sub, _round_down(elems_budget // col_lanes, sub))

    if block_rows is None:
        block_rows = min(n, row_cap)
    block_rows = min(block_rows, n)
    if block_rows != n:
        block_rows = max(sub, _round_down(block_rows, sub))
        if block_rows > n:
            block_rows = n  # full extent is always legal

    # Megacore / pipeline balance: aim for >= 8 tiles when there is enough work,
    # without shrinking blocks below ~512 KiB of input data per block.
    if not user_rows:
        n_col_tiles = pl.cdiv(c, block_cols)
        min_block_elems = max(sub * 128, (512 * 1024) // itemsize)
        while pl.cdiv(n, block_rows) * n_col_tiles < 8 and block_rows > sub:
            new_rows = max(sub, _round_down(block_rows // 2, sub))
            if new_rows == block_rows or new_rows * col_lanes < min_block_elems:
                break
            block_rows = new_rows

    return block_rows, block_cols


def _masked_bce_kernel(x_ref, t_ref, o_ref, *, n_rows, n_cols,
                       block_rows, block_cols, row_ragged, col_ragged):
    """One (block_rows, block_cols) tile -> one (8, 128) partial-sum output block."""
    x = x_ref[...].astype(jnp.float32)
    t = t_ref[...].astype(jnp.float32)

    # Target mask (semantics): entries with t < -1e-6 are excluded.
    valid = t >= -1e-6

    # Ragged-tail masks only when the grid is actually ragged (static flags), and
    # only as (rows,1)/(1,cols) vectors -> one broadcast AND per element, not 2-D iotas.
    if row_ragged:
        i = pl.program_id(0)
        row_ids = i * block_rows + lax.broadcasted_iota(jnp.int32, (block_rows, 1), 0)
        valid = jnp.logical_and(valid, row_ids < n_rows)
    if col_ragged:
        j = pl.program_id(1)
        col_ids = j * block_cols + lax.broadcasted_iota(jnp.int32, (1, block_cols), 1)
        valid = jnp.logical_and(valid, col_ids < n_cols)

    # Numerically stable BCE-with-logits: max(x,0) - x*t + log1p(exp(-|x|))
    elem = jnp.maximum(x, 0.0) - x * t + jnp.log1p(jnp.exp(-jnp.abs(x)))
    # jnp.where is a select: NaN/Inf produced from OOB garbage cannot propagate.
    s = jnp.sum(jnp.where(valid, elem, 0.0))

    # Lane-dense, unmasked (8,128) store: scalar in [0,0], zeros elsewhere.
    sub_id = lax.broadcasted_iota(jnp.int32, (8, 128), 0)
    lane_id = lax.broadcasted_iota(jnp.int32, (8, 128), 1)
    o_ref[...] = jnp.where((sub_id + lane_id) == 0, s, 0.0).astype(jnp.float32)


@functools.partial(jax.jit, static_argnames=("block_rows", "block_cols"))
def masked_bce_loss(inputs: jax.Array, targets: jax.Array, *,
                    block_rows: int | None = None,
                    block_cols: int | None = None) -> jax.Array:
    """inputs, targets: (N, C). Returns scalar loss normalised by N."""
    assert inputs.shape == targets.shape, (inputs.shape, targets.shape)
    n, c = inputs.shape

    # Keep f32/bf16 as-is (bf16 halves HBM traffic; upcast happens in-kernel).
    if inputs.dtype not in (jnp.float32, jnp.bfloat16):
        inputs = inputs.astype(jnp.float32)
    if targets.dtype not in (jnp.float32, jnp.bfloat16):
        targets = targets.astype(jnp.float32)
    itemsize = max(jnp.dtype(inputs.dtype).itemsize, jnp.dtype(targets.dtype).itemsize)

    # Chip-aware budgets (v5e/v6e: 8 MiB blocks, 64 MiB limit; v7x: 4 MiB / 32 MiB).
    vmem_cap = _vmem_capacity_bytes()
    target_block_bytes = min(max(vmem_cap // 16, 2 * 1024 * 1024), 8 * 1024 * 1024)
    vmem_limit = int(min(vmem_cap // 2, 64 * 1024 * 1024))

    # Opportunistic lane-dense flatten: free metadata reshape of the contiguous (N,C)
    # array when C wastes lanes and N*C divides a lane width.
    x2d, t2d = inputs, targets
    rows, cols = n, c
    if block_cols is None and (c % 128 != 0):
        w = _flatten_width(n * c)
        if w is not None:
            rows, cols = (n * c) // w, w
            x2d = inputs.reshape(rows, cols)
            t2d = targets.reshape(rows, cols)

    br, bc = _choose_tiles(rows, cols, itemsize, target_block_bytes,
                           block_rows, block_cols)
    n_row_tiles = pl.cdiv(rows, br)
    n_col_tiles = pl.cdiv(cols, bc)
    row_ragged = (rows % br) != 0
    col_ragged = (cols % bc) != 0

    kernel = functools.partial(
        _masked_bce_kernel,
        n_rows=rows, n_cols=cols, block_rows=br, block_cols=bc,
        row_ragged=row_ragged, col_ragged=col_ragged)

    partials = pl.pallas_call(
        kernel,
        out_shape=jax.ShapeDtypeStruct((n_row_tiles * 8, n_col_tiles * 128), jnp.float32),
        grid=(n_row_tiles, n_col_tiles),
        in_specs=[
            pl.BlockSpec((br, bc), lambda i, j: (i, j)),
            pl.BlockSpec((br, bc), lambda i, j: (i, j)),
        ],
        out_specs=pl.BlockSpec((8, 128), lambda i, j: (i, j)),
        compiler_params=pltpu.CompilerParams(
            dimension_semantics=("parallel", "parallel"),  # independent tiles -> megacore OK
            vmem_limit_bytes=vmem_limit,
        ),
    )(x2d, t2d)

    return jnp.sum(partials) / jnp.float32(n)


def _reference_loss(inputs, targets):
    """Pure-JAX reference mirroring the PyTorch loop."""
    mask = targets >= -1e-6
    elem = targets * jax.nn.log_sigmoid(inputs) + (1.0 - targets) * jax.nn.log_sigmoid(-inputs)
    elem = jnp.where(mask, elem, 0.0)
    return -jnp.sum(elem) / inputs.shape[0]


if __name__ == "__main__":
    # 1) Small (N, C) logits/targets consistent with the module.
    k1, k2, k3 = jax.random.split(jax.random.PRNGKey(0), 3)
    N, C = 4, 10
    inputs = jax.random.normal(k1, (N, C), dtype=jnp.float32)
    targets = jax.random.uniform(k2, (N, C), dtype=jnp.float32)
    targets = jnp.where(jax.random.bernoulli(k3, p=0.3, shape=(N, C)), -1.0, targets)
    loss = masked_bce_loss(inputs, targets)
    jax.block_until_ready(loss)
    ref = _reference_loss(inputs, targets)
    assert jnp.allclose(loss, ref, rtol=1e-5, atol=1e-5), (loss, ref)

    # 2) Ragged row & column tails on the (N, C) path (forced small blocks).
    k4, k5, k6 = jax.random.split(jax.random.PRNGKey(1), 3)
    N2, C2 = 37, 300
    inputs2 = jax.random.normal(k4, (N2, C2), dtype=jnp.float32)
    targets2 = jax.random.uniform(k5, (N2, C2), dtype=jnp.float32)
    targets2 = jnp.where(jax.random.bernoulli(k6, p=0.3, shape=(N2, C2)), -1.0, targets2)
    loss2 = masked_bce_loss(inputs2, targets2, block_rows=8, block_cols=128)
    jax.block_until_ready(loss2)
    ref2 = _reference_loss(inputs2, targets2)
    assert jnp.allclose(loss2, ref2, rtol=1e-5, atol=1e-5), (loss2, ref2)

    # 3) Lane-dense flattened path (C not lane-aligned, N*C divisible by 512),
    #    with a forced small row block so the flattened row tail is ragged.
    k7, k8, k9 = jax.random.split(jax.random.PRNGKey(2), 3)
    N3, C3 = 48, 160
    inputs3 = jax.random.normal(k7, (N3, C3), dtype=jnp.float32)
    targets3 = jax.random.uniform(k8, (N3, C3), dtype=jnp.float32)
    targets3 = jnp.where(jax.random.bernoulli(k9, p=0.3, shape=(N3, C3)), -1.0, targets3)
    loss3 = masked_bce_loss(inputs3, targets3, block_rows=8)
    jax.block_until_ready(loss3)
    ref3 = _reference_loss(inputs3, targets3)
    assert jnp.allclose(loss3, ref3, rtol=1e-5, atol=1e-5), (loss3, ref3)

    # 4) bf16 logits / f32 targets (dtype-aware tiling; in-kernel upcast to f32).
    inputs4 = inputs2.astype(jnp.bfloat16)
    loss4 = masked_bce_loss(inputs4, targets2)
    jax.block_until_ready(loss4)
    ref4 = _reference_loss(inputs4.astype(jnp.float32), targets2)
    assert jnp.allclose(loss4, ref4, rtol=1e-4, atol=1e-4), (loss4, ref4)

    print("KERNEL_OK")
</pallas_src>

<mosaic_0001>
module attributes {stable_mosaic.version = 11 : i64} {
  func.func @_masked_bce_kernel(%arg0: i32, %arg1: i32, %arg2: memref<4x10xf32, #tpu.memory_space<vmem>>, %arg3: memref<4x10xf32, #tpu.memory_space<vmem>>, %arg4: memref<8x128xf32, #tpu.memory_space<vmem>>) attributes {dimension_semantics = [#tpu.dimension_semantics<parallel>, #tpu.dimension_semantics<parallel>], iteration_bounds = array<i64: 1, 1>, scalar_prefetch = 0 : i64, scratch_operands = 0 : i64, tpu.core_type = #tpu.core_type<tc>, window_params = [{transform_indices = @transform_0, window_bounds = array<i64: 4, 10>}, {transform_indices = @transform_1, window_bounds = array<i64: 4, 10>}, {transform_indices = @transform_2, window_bounds = array<i64: 8, 128>}]} {
    %c0 = arith.constant 0 : index
    %c0_0 = arith.constant 0 : index
    %0 = vector.load %arg2[%c0, %c0_0] : memref<4x10xf32, #tpu.memory_space<vmem>>, vector<4x10xf32>
    %c0_1 = arith.constant 0 : index
    %c0_2 = arith.constant 0 : index
    %1 = vector.load %arg3[%c0_1, %c0_2] : memref<4x10xf32, #tpu.memory_space<vmem>>, vector<4x10xf32>
    %cst = arith.constant -9.99999997E-7 : f32
    %2 = vector.broadcast %cst : f32 to vector<4x10xf32>
    %3 = arith.cmpf oge, %1, %2 : vector<4x10xf32>
    %cst_3 = arith.constant 0.000000e+00 : f32
    %4 = vector.broadcast %cst_3 : f32 to vector<4x10xf32>
    %5 = arith.maximumf %0, %4 : vector<4x10xf32>
    %6 = arith.mulf %0, %1 : vector<4x10xf32>
    %7 = arith.subf %5, %6 : vector<4x10xf32>
    %8 = math.absf %0 : vector<4x10xf32>
    %cst_4 = arith.constant 0.000000e+00 : f32
    %9 = vector.broadcast %cst_4 : f32 to vector<4x10xf32>
    %10 = arith.subf %9, %8 : vector<4x10xf32>
    %11 = math.exp %10 : vector<4x10xf32>
    %12 = math.log1p %11 : vector<4x10xf32>
    %13 = arith.addf %7, %12 : vector<4x10xf32>
    %cst_5 = arith.constant 0.000000e+00 : f32
    %14 = vector.broadcast %cst_5 : f32 to vector<4x10xf32>
    %15 = arith.select %3, %13, %14 : vector<4x10xi1>, vector<4x10xf32>
    %16 = vector.shape_cast %15 : vector<4x10xf32> to vector<1x4x10xf32>
    %cst_6 = arith.constant dense<0.000000e+00> : vector<1xf32>
    %17 = vector.multi_reduction <add>, %16, %cst_6 [1, 2] : vector<1x4x10xf32> to vector<1xf32>
    %18 = vector.shape_cast %17 : vector<1xf32> to vector<1x1x1xf32>
    %19 = vector.extract %18[0, 0, 0] : f32 from vector<1x1x1xf32>
    %20 = tpu.iota {dimensions = array<i32: 0>} : vector<8x128xi32>
    %21 = tpu.iota {dimensions = array<i32: 1>} : vector<8x128xi32>
    %22 = arith.addi %20, %21 : vector<8x128xi32>
    %c0_i32 = arith.constant 0 : i32
    %23 = vector.broadcast %c0_i32 : i32 to vector<8x128xi32>
    %24 = arith.cmpi eq, %22, %23 : vector<8x128xi32>
    %cst_7 = arith.constant 0.000000e+00 : f32
    %25 = vector.broadcast %19 : f32 to vector<8x128xf32>
    %26 = vector.broadcast %cst_7 : f32 to vector<8x128xf32>
    %27 = arith.select %24, %25, %26 : vector<8x128xi1>, vector<8x128xf32>
    %c0_8 = arith.constant 0 : index
    %c0_9 = arith.constant 0 : index
    %28 = vector.load %arg4[%c0_8, %c0_9] : memref<8x128xf32, #tpu.memory_space<vmem>>, vector<8x128xf32>
    tpu.vector_store %arg4[%c0_8, %c0_9], %27 {strides = array<i32>} : memref<8x128xf32, #tpu.memory_space<vmem>>, vector<8x128xf32>,
    return
  }
  func.func @transform_0(%arg0: i32, %arg1: i32) -> (i32, i32) {
    %c0_i32 = arith.constant 0 : i32
    return %arg0, %arg1 : i32, i32
  }
  func.func @transform_1(%arg0: i32, %arg1: i32) -> (i32, i32) {
    %c0_i32 = arith.constant 0 : i32
    return %arg0, %arg1 : i32, i32
  }
  func.func @transform_2(%arg0: i32, %arg1: i32) -> (i32, i32) {
    %c0_i32 = arith.constant 0 : i32
    return %arg0, %arg1 : i32, i32
  }
}

</mosaic_0001>

<llo_original>
// kernel: masked_bce_loss.1
$region0: #{masked_bce_loss.1}
  #allocation0 [shape = 'u32[]', space=smem, size = 0x4, offset = 0x4, fixed_abs, tag = 'smem constant byte address 0x4 - core index']
  #allocation1 [shape = 'u32[144,128]{1,0:T(1,128)}', space=vmem, size = 0x12000, scoped, tag = 'internal scratch']
  %s0 = inlined_call_operand.hbm [shape: f32[4,10], index: 0, kind: input, shape index: {}]
  %s1 = inlined_call_operand.hbm [shape: f32[4,10], index: 1, kind: input, shape index: {}]
  %s2 = inlined_call_operand.vmem [shape: f32[8,128], index: 2, kind: output, shape index: {}]
  %s3 = sld [smem:[#allocation0]]
  $region26: #{masked_bce_loss.1} parent=0
    _
  %s5 = ssub.s32 1, %s3
  %s6 = scalar_select 0, %s5, %s3
  $region1: #{masked_bce_loss.1} parent=0
    #allocation2 [shape = 'u8[2048]{0}', space=vmem, size = 0x800, scoped, tag = 'input window, operand 0, single buffered']
    #allocation3 [shape = 's32[1]{0}', space=sflag, size = 0x4, scoped, tag = 'scoped memory for masked_bce_loss.1']
    #allocation4 [shape = 'u8[2048]{0}', space=vmem, size = 0x800, scoped, tag = 'input window, operand 1, single buffered']
    #allocation5 [shape = 's32[1]{0}', space=sflag, size = 0x4, scoped, tag = 'scoped memory for masked_bce_loss.1']
    %7 = vsyncpa [#allocation3], 0
    %8 = vsyncpa [#allocation5], 0
    // Predicated region
    $region2: #{masked_bce_loss.1} parent=1 // pred_check
      _
    $region3: #{masked_bce_loss.1} parent=1 // pred_check_branch
      %10 = sbr.rel (0) target = $region5
    $region4: #{masked_bce_loss.1} parent=1 // pred_region
      %s12 = ssub.s32 64, 64
      %13 = vsyncadd [#allocation3], %s12
      %s15 = sshll.u32 [#allocation2], 4
      %s16 = int_to_ptr.vmem [resolvable:$true] %s15
      %18 = dma.hbm_to_vmem [thread:$0]  %s0, 64, %s16, [#allocation3]
    $region5: #{masked_bce_loss.1} parent=1 // pred_fallthru
      _
    // Predicated region
    $region6: #{masked_bce_loss.1} parent=1 // pred_check
      _
    $region7: #{masked_bce_loss.1} parent=1 // pred_check_branch
      %20 = sbr.rel (0) target = $region9
    $region8: #{masked_bce_loss.1} parent=1 // pred_region
      %s22 = ssub.s32 64, 64
      %23 = vsyncadd [#allocation5], %s22
      %s25 = sshll.u32 [#allocation4], 4
      %s26 = int_to_ptr.vmem [resolvable:$true] %s25
      %28 = dma.hbm_to_vmem [thread:$0]  %s1, 64, %s26, [#allocation5]
    $region9: #{masked_bce_loss.1} parent=1 // pred_fallthru
      _
    // Predicated region
    $region10: #{masked_bce_loss.1} parent=1 // pred_check
      _
    $region11: #{masked_bce_loss.1} parent=1 // pred_check_branch
      %30 = sbr.rel (0) target = $region13
    $region12: #{masked_bce_loss.1} parent=1 // pred_region
      %31 = dma.done [#allocation3], 64
    $region13: #{masked_bce_loss.1} parent=1 // pred_fallthru
      _
    // Predicated region
    $region14: #{masked_bce_loss.1} parent=1 // pred_check
      _
    $region15: #{masked_bce_loss.1} parent=1 // pred_check_branch
      %33 = sbr.rel (0) target = $region17
    $region16: #{masked_bce_loss.1} parent=1 // pred_region
      %34 = dma.done [#allocation5], 64
    $region17: #{masked_bce_loss.1} parent=1 // pred_fallthru
      _
    %v35 = vld [vmem:[#allocation2] sm:$0xf]
    %v36 = vld [vmem:[#allocation4] sm:$0xf]
    %vm37 = vcmp.ge.f32.partialorder %v36, -1e-06
    %v38 = vmax.f32 %v35, 0.0
    %v39 = vmul.f32 %v35, %v36
    %v40 = vsub.f32 %v38, %v39
    %v41 = vand.u32 2147483647, %v35
    %v42 = vsub.f32 0.0, %v41
    %v43 = vmul.f32 %v42, 1.442695
    %v44 = vpow.pop %v43
    %v45 = vadd.f32 %v44, 1.0
    %v46 = vlog2.pop %v45
    %v47 = vmul.f32 %v46, 0.6931472
    %v48 = vmul.f32 -0.5, %v44
    %v49 = vadd.f32 %v48, 1.0
    %v50 = vmul.f32 %v49, %v44
    %v51 = vand.u32 2147483647, %v44
    %vm52 = vcmp.lt.f32.partialorder %v51, 0.0004427343
    %v53 = vsel %vm52, %v50, %v47
    %v54 = vadd.f32 %v40, %v53
    %v55 = vsel %vm37, %v54, 0.0
    %vm56 = vcmask 76800
    %v57 = vsel %vm56, %v55, 0.0
    %58 = vadd.xlane.f32.xlu0 %v57
    %v59 = vpop.xlane.xlu0 %58
    %v60 = vrot.slane %v59, 4
    %v61 = vadd.f32 %v59, %v60
    %v62 = vrot.slane %v61, 2
    %v63 = vadd.f32 %v61, %v62
    %v64 = vrot.slane %v63, 1
    %v65 = vadd.f32 %v63, %v64
    %s66 = vtos %v65
    %v67 = vlaneseq
    %v68 = vshrl.u32 %v67, 7
    %v69 = vlaneseq
    %v70 = vand.u32 %v69, 127
    %v71 = vadd.s32 %v68, %v70
    %vm72 = vcmp.eq.s32.totalorder %v71, 0
    %v73 = vstv %s66
    %v74 = vsel %vm72, %v73, 0.0
    %75 = vst [vmem:[%s2] sm:$0xff] %v74
    // Predicated region
    $region18: #{masked_bce_loss.1} parent=1 // pred_check
      _
    $region19: #{masked_bce_loss.1} parent=1 // pred_check_branch
      %77 = sbr.rel (0) target = $region21
    $region20: #{masked_bce_loss.1} parent=1 // pred_region
      _
    $region21: #{masked_bce_loss.1} parent=1 // pred_fallthru
      _
    // Predicated region
    $region22: #{masked_bce_loss.1} parent=1 // pred_check
      _
    $region23: #{masked_bce_loss.1} parent=1 // pred_check_branch
      %79 = sbr.rel (0) target = $region25
    $region24: #{masked_bce_loss.1} parent=1 // pred_region
      _
    $region25: #{masked_bce_loss.1} parent=1 // pred_fallthru
      _
    %80 = vsyncpa [#allocation3], 1
    %81 = vsyncpa [#allocation5], 1

</llo_original>
